<compile_context>
chip_gen: v5e
topology: v5e:2x2
jax: 0.10.0
libtpu: 0.0.40
codegen_flags: <defaults>
</compile_context>

<pallas_src>
import functools
import math

import jax
import jax.numpy as jnp
from jax.experimental import pallas as pl
from jax.experimental.pallas import tpu as pltpu

ACT_DTYPE = jnp.bfloat16
DEFAULT_BLOCK_ROWS = 512  # sweep 256-512 at production shapes


def _pick_block_rows(n, target=DEFAULT_BLOCK_ROWS):
    """Largest row tile <= target that divides n (kept a multiple of 16)."""
    if n <= target:
        return n
    for br in (512, 256, 128, 64, 32, 16):
        if br <= target and n % br == 0:
            return br
    # TODO(synk): pad the row count instead of falling back to one huge block.
    return n


_PARALLEL = pltpu.CompilerParams(dimension_semantics=("parallel",))


# ----------------------------------------------------------------------------
# Pallas kernels
# ----------------------------------------------------------------------------
def _dense_kernel(x_ref, w_ref, b_ref, o_ref, *, activation):
    """o = act(x @ w + b) on one row tile; f32 MXU accumulation."""
    y = jnp.dot(x_ref[...], w_ref[...], preferred_element_type=jnp.float32)
    y = y + b_ref[...].astype(jnp.float32)
    if activation == "relu":
        y = jnp.maximum(y, 0.0)
    elif activation == "gelu":
        # TODO(synk): HF BERT uses exact (erf) gelu; tanh approximation used here.
        y = jax.nn.gelu(y, approximate=True)
    o_ref[...] = y.astype(o_ref.dtype)


def _dense_res_ln_kernel(x_ref, w_ref, b_ref, r_ref, g_ref, bb_ref, o_ref, *, eps):
    """o = LayerNorm(x @ w + b + residual); everything fused in VMEM."""
    y = jnp.dot(x_ref[...], w_ref[...], preferred_element_type=jnp.float32)
    y = y + b_ref[...].astype(jnp.float32) + r_ref[...].astype(jnp.float32)
    mu = jnp.mean(y, axis=-1, keepdims=True)
    var = jnp.mean(jnp.square(y - mu), axis=-1, keepdims=True)
    yn = (y - mu) * jax.lax.rsqrt(var + eps)
    o_ref[...] = (yn * g_ref[...].astype(jnp.float32)
                  + bb_ref[...].astype(jnp.float32)).astype(o_ref.dtype)


def _layernorm_kernel(x_ref, g_ref, b_ref, o_ref, *, eps):
    """Plain LayerNorm over the last dim (f32 statistics)."""
    x = x_ref[...].astype(jnp.float32)
    mu = jnp.mean(x, axis=-1, keepdims=True)
    var = jnp.mean(jnp.square(x - mu), axis=-1, keepdims=True)
    y = (x - mu) * jax.lax.rsqrt(var + eps)
    o_ref[...] = (y * g_ref[...].astype(jnp.float32)
                  + b_ref[...].astype(jnp.float32)).astype(o_ref.dtype)


def _attention_kernel(qkv_ref, bias_ref, o_ref, *, n_heads, scale):
    """All heads of one batch element per grid step.

    qkv_ref: [1, S, 3H] fused QKV slab (heads are contiguous dh-wide column
    slices, so no HBM head reshape/transpose is ever materialized).
    bias_ref: [1, 1, S] precomputed additive mask bias ((1-mask)*-1e4).
    """
    h = o_ref.shape[2]
    dh = h // n_heads
    bias = bias_ref[0].astype(jnp.float32)            # [1, S] -> broadcasts over q
    ctx_heads = []
    for hd in range(n_heads):                          # static, unrolled
        q = qkv_ref[0, :, pl.ds(hd * dh, dh)].astype(jnp.float32)          # [S, dh]
        k = qkv_ref[0, :, pl.ds(h + hd * dh, dh)].astype(jnp.float32)      # [S, dh]
        v = qkv_ref[0, :, pl.ds(2 * h + hd * dh, dh)].astype(jnp.float32)  # [S, dh]
        # Contract over dh on both operands (no explicit k.T relayout).
        scores = jax.lax.dot_general(
            q, k, (((1,), (1,)), ((), ())),
            preferred_element_type=jnp.float32) * scale                    # [S, S]
        scores = scores + bias
        scores = scores - jnp.max(scores, axis=-1, keepdims=True)
        p = jnp.exp(scores)
        p = p * pl.reciprocal(jnp.sum(p, axis=-1, keepdims=True), approx=True)
        ctx_heads.append(jnp.dot(p, v, preferred_element_type=jnp.float32))
    # Single lane-dense [S, H] store per grid step.
    o_ref[0] = jnp.concatenate(ctx_heads, axis=-1).astype(o_ref.dtype)
    # TODO(synk): for S >= 1024 convert to a flash-style online-softmax with a
    # KV grid axis to keep VMEM flat instead of materializing [S, S] scores.


# ----------------------------------------------------------------------------
# Pallas wrappers
# ----------------------------------------------------------------------------
def dense(x, w, b, activation=None, block_rows=DEFAULT_BLOCK_ROWS, out_dtype=None):
    """x: [N, Din], w: [Din, Dout], b: [Dout] -> act(x @ w + b) [N, Dout]."""
    n, din = x.shape
    dout = w.shape[1]
    out_dtype = x.dtype if out_dtype is None else out_dtype
    br = _pick_block_rows(n, block_rows)
    return pl.pallas_call(
        functools.partial(_dense_kernel, activation=activation),
        out_shape=jax.ShapeDtypeStruct((n, dout), out_dtype),
        grid=(n // br,),
        in_specs=[
            pl.BlockSpec((br, din), lambda i: (i, 0)),
            pl.BlockSpec((din, dout), lambda i: (0, 0)),
            pl.BlockSpec((1, dout), lambda i: (0, 0)),
        ],
        out_specs=pl.BlockSpec((br, dout), lambda i: (i, 0)),
        compiler_params=_PARALLEL,
    )(x, w, b.reshape(1, dout))


def dense_res_ln(x, w, b, residual, gamma, beta, eps=1e-12,
                 block_rows=DEFAULT_BLOCK_ROWS, out_dtype=None):
    """LayerNorm(x @ w + b + residual), fused in one kernel."""
    n, din = x.shape
    dout = w.shape[1]
    out_dtype = residual.dtype if out_dtype is None else out_dtype
    br = _pick_block_rows(n, block_rows)
    return pl.pallas_call(
        functools.partial(_dense_res_ln_kernel, eps=eps),
        out_shape=jax.ShapeDtypeStruct((n, dout), out_dtype),
        grid=(n // br,),
        in_specs=[
            pl.BlockSpec((br, din), lambda i: (i, 0)),
            pl.BlockSpec((din, dout), lambda i: (0, 0)),
            pl.BlockSpec((1, dout), lambda i: (0, 0)),
            pl.BlockSpec((br, dout), lambda i: (i, 0)),
            pl.BlockSpec((1, dout), lambda i: (0, 0)),
            pl.BlockSpec((1, dout), lambda i: (0, 0)),
        ],
        out_specs=pl.BlockSpec((br, dout), lambda i: (i, 0)),
        compiler_params=_PARALLEL,
    )(x, w, b.reshape(1, dout), residual,
      gamma.reshape(1, dout), beta.reshape(1, dout))


def layernorm(x, gamma, beta, eps=1e-12, block_rows=DEFAULT_BLOCK_ROWS,
              out_dtype=None):
    """LayerNorm over the last dim (no residual, no wasted zero DMA)."""
    n, h = x.shape
    out_dtype = x.dtype if out_dtype is None else out_dtype
    br = _pick_block_rows(n, block_rows)
    return pl.pallas_call(
        functools.partial(_layernorm_kernel, eps=eps),
        out_shape=jax.ShapeDtypeStruct((n, h), out_dtype),
        grid=(n // br,),
        in_specs=[
            pl.BlockSpec((br, h), lambda i: (i, 0)),
            pl.BlockSpec((1, h), lambda i: (0, 0)),
            pl.BlockSpec((1, h), lambda i: (0, 0)),
        ],
        out_specs=pl.BlockSpec((br, h), lambda i: (i, 0)),
        compiler_params=_PARALLEL,
    )(x, gamma.reshape(1, h), beta.reshape(1, h))


def mha_attention(qkv, mask_bias, n_heads):
    """qkv: [B, S, 3H] fused projections; mask_bias: [B, 1, S] -> ctx [B, S, H]."""
    b, s, h3 = qkv.shape
    h = h3 // 3
    dh = h // n_heads
    scale = 1.0 / math.sqrt(dh)
    return pl.pallas_call(
        functools.partial(_attention_kernel, n_heads=n_heads, scale=scale),
        out_shape=jax.ShapeDtypeStruct((b, s, h), qkv.dtype),
        grid=(b,),
        in_specs=[
            pl.BlockSpec((1, s, h3), lambda i: (i, 0, 0)),
            pl.BlockSpec((1, 1, s), lambda i: (i, 0, 0)),
        ],
        out_specs=pl.BlockSpec((1, s, h), lambda i: (i, 0, 0)),
        compiler_params=_PARALLEL,
    )(qkv, mask_bias)


# ----------------------------------------------------------------------------
# Parameter init (synthetic, deterministic; matmul weights stored in bf16)
# ----------------------------------------------------------------------------
def init_params(key, cfg):
    H = cfg["hidden"]
    I = cfg["intermediate"]
    keys = jax.random.split(key, 5 + cfg["layers"])

    def normal(k, shape, dtype=ACT_DTYPE):
        return (0.02 * jax.random.normal(k, shape, jnp.float32)).astype(dtype)

    params = {
        "word_emb": normal(keys[0], (cfg["vocab"], H), jnp.float32),
        "pos_emb": normal(keys[1], (cfg["max_pos"], H), jnp.float32),
        "type_emb": normal(keys[2], (cfg["type_vocab"], H), jnp.float32),
        "emb_ln_g": jnp.ones((H,), jnp.float32),
        "emb_ln_b": jnp.zeros((H,), jnp.float32),
    }
    pk = jax.random.split(keys[3], 2)
    params["proj_w1"] = normal(pk[0], (H, H))
    params["proj_b1"] = jnp.zeros((H,), jnp.float32)
    params["proj_w2"] = normal(pk[1], (H, cfg["proj_dim"]))
    params["proj_b2"] = jnp.zeros((cfg["proj_dim"],), jnp.float32)

    layers = []
    for l in range(cfg["layers"]):
        lk = jax.random.split(keys[4 + l], 6)
        # Fused QKV weight: [H, 3H] = concat(wq, wk, wv) along the output dim.
        wqkv = jnp.concatenate(
            [normal(lk[0], (H, H)), normal(lk[1], (H, H)), normal(lk[2], (H, H))],
            axis=1)
        layers.append({
            "wqkv": wqkv, "bqkv": jnp.zeros((3 * H,), jnp.float32),
            "wo": normal(lk[3], (H, H)), "bo": jnp.zeros((H,), jnp.float32),
            "ln1_g": jnp.ones((H,), jnp.float32), "ln1_b": jnp.zeros((H,), jnp.float32),
            "w1": normal(lk[4], (H, I)), "b1": jnp.zeros((I,), jnp.float32),
            "w2": normal(lk[5], (I, H)), "b2": jnp.zeros((H,), jnp.float32),
            "ln2_g": jnp.ones((H,), jnp.float32), "ln2_b": jnp.zeros((H,), jnp.float32),
        })
    params["layers"] = layers
    return params


# ----------------------------------------------------------------------------
# Forward pass (ContrastiveBERTModel.forward)
# ----------------------------------------------------------------------------
def contrastive_bert_forward(params, input_ids, attention_mask, cfg):
    B, S = input_ids.shape
    H = cfg["hidden"]
    nH = cfg["heads"]

    # --- BERT embeddings (token gathers are XLA glue; LN is a Pallas kernel) ---
    x = (params["word_emb"][input_ids]
         + params["pos_emb"][:S][None, :, :]
         + params["type_emb"][0][None, None, :])
    x2d = layernorm(x.reshape(B * S, H), params["emb_ln_g"], params["emb_ln_b"],
                    out_dtype=ACT_DTYPE)

    # Additive attention bias, computed once per forward: [B, 1, S], f32.
    mask_bias = ((1.0 - attention_mask.astype(jnp.float32)) * -10000.0)[:, None, :]

    # --- Transformer encoder layers ---
    for lyr in params["layers"]:
        qkv = dense(x2d, lyr["wqkv"], lyr["bqkv"])                    # [B*S, 3H]
        ctx = mha_attention(qkv.reshape(B, S, 3 * H), mask_bias, nH)  # [B, S, H]
        x2d = dense_res_ln(ctx.reshape(B * S, H), lyr["wo"], lyr["bo"],
                           x2d, lyr["ln1_g"], lyr["ln1_b"])
        ffn = dense(x2d, lyr["w1"], lyr["b1"], activation="gelu")     # [B*S, I]
        x2d = dense_res_ln(ffn, lyr["w2"], lyr["b2"],
                           x2d, lyr["ln2_g"], lyr["ln2_b"])

    # --- CLS embedding + projection head: Linear -> ReLU -> Linear ---
    cls_embedding = x2d.reshape(B, S, H)[:, 0, :]                     # [B, H]
    h = dense(cls_embedding, params["proj_w1"], params["proj_b1"], activation="relu")
    projected = dense(h, params["proj_w2"], params["proj_b2"], out_dtype=jnp.float32)
    return projected                                                  # [B, proj_dim]


# ----------------------------------------------------------------------------
if __name__ == "__main__":
    cfg = dict(
        vocab=100,       # tiny synthetic vocab (stand-in for bert-base-chinese)
        hidden=32,
        heads=2,
        intermediate=64,
        layers=2,
        max_pos=16,
        type_vocab=2,
        proj_dim=16,     # scaled-down projection_dim (256 in the original)
    )
    key = jax.random.PRNGKey(0)
    pkey, ikey = jax.random.split(key)
    params = init_params(pkey, cfg)

    B, S = 2, 8
    input_ids = jax.random.randint(ikey, (B, S), 0, cfg["vocab"], dtype=jnp.int32)
    attention_mask = jnp.ones((B, S), jnp.int32).at[1, 6:].set(0)  # second seq padded

    out = contrastive_bert_forward(params, input_ids, attention_mask, cfg)
    out = jax.block_until_ready(out)
    assert out.shape == (B, cfg["proj_dim"]), out.shape
    assert bool(jnp.all(jnp.isfinite(out)))
    print("KERNEL_OK")
</pallas_src>

<mosaic_0001>
module attributes {stable_mosaic.version = 11 : i64} {
  func.func @_layernorm_kernel(%arg0: i32, %arg1: memref<16x32xf32, #tpu.memory_space<vmem>>, %arg2: memref<1x32xf32, #tpu.memory_space<vmem>>, %arg3: memref<1x32xf32, #tpu.memory_space<vmem>>, %arg4: memref<16x32xbf16, #tpu.memory_space<vmem>>) attributes {dimension_semantics = [#tpu.dimension_semantics<parallel>], iteration_bounds = array<i64: 1>, scalar_prefetch = 0 : i64, scratch_operands = 0 : i64, tpu.core_type = #tpu.core_type<tc>, window_params = [{transform_indices = @transform_0, window_bounds = array<i64: 16, 32>}, {pipeline_mode = #tpu.pipeline_mode<synchronous>, transform_indices = @transform_1, window_bounds = array<i64: 1, 32>}, {pipeline_mode = #tpu.pipeline_mode<synchronous>, transform_indices = @transform_2, window_bounds = array<i64: 1, 32>}, {transform_indices = @transform_3, window_bounds = array<i64: 16, 32>}]} {
    %c0 = arith.constant 0 : index
    %c0_0 = arith.constant 0 : index
    %0 = vector.load %arg1[%c0, %c0_0] : memref<16x32xf32, #tpu.memory_space<vmem>>, vector<16x32xf32>
    %cst = arith.constant dense<0.000000e+00> : vector<16xf32>
    %1 = vector.multi_reduction <add>, %0, %cst [1] : vector<16x32xf32> to vector<16xf32>
    %2 = vector.shape_cast %1 : vector<16xf32> to vector<16x1xf32>
    %cst_1 = arith.constant 3.200000e+01 : f32
    %3 = vector.broadcast %cst_1 : f32 to vector<16x1xf32>
    %4 = arith.divf %2, %3 : vector<16x1xf32>
    %5 = vector.broadcast %4 : vector<16x1xf32> to vector<16x32xf32>
    %6 = arith.subf %0, %5 : vector<16x32xf32>
    %7 = arith.mulf %6, %6 : vector<16x32xf32>
    %cst_2 = arith.constant dense<0.000000e+00> : vector<16xf32>
    %8 = vector.multi_reduction <add>, %7, %cst_2 [1] : vector<16x32xf32> to vector<16xf32>
    %9 = vector.shape_cast %8 : vector<16xf32> to vector<16x1xf32>
    %cst_3 = arith.constant 3.200000e+01 : f32
    %10 = vector.broadcast %cst_3 : f32 to vector<16x1xf32>
    %11 = arith.divf %9, %10 : vector<16x1xf32>
    %12 = vector.broadcast %4 : vector<16x1xf32> to vector<16x32xf32>
    %13 = arith.subf %0, %12 : vector<16x32xf32>
    %cst_4 = arith.constant 9.99999996E-13 : f32
    %14 = vector.broadcast %cst_4 : f32 to vector<16x1xf32>
    %15 = arith.addf %11, %14 : vector<16x1xf32>
    %16 = math.rsqrt %15 : vector<16x1xf32>
    %17 = vector.broadcast %16 : vector<16x1xf32> to vector<16x32xf32>
    %18 = arith.mulf %13, %17 : vector<16x32xf32>
    %c0_5 = arith.constant 0 : index
    %c0_6 = arith.constant 0 : index
    %19 = vector.load %arg2[%c0_5, %c0_6] : memref<1x32xf32, #tpu.memory_space<vmem>>, vector<1x32xf32>
    %20 = vector.broadcast %19 : vector<1x32xf32> to vector<16x32xf32>
    %21 = arith.mulf %18, %20 : vector<16x32xf32>
    %c0_7 = arith.constant 0 : index
    %c0_8 = arith.constant 0 : index
    %22 = vector.load %arg3[%c0_7, %c0_8] : memref<1x32xf32, #tpu.memory_space<vmem>>, vector<1x32xf32>
    %23 = vector.broadcast %22 : vector<1x32xf32> to vector<16x32xf32>
    %24 = arith.addf %21, %23 : vector<16x32xf32>
    %25 = arith.truncf %24 : vector<16x32xf32> to vector<16x32xbf16>
    %c0_9 = arith.constant 0 : index
    %c0_10 = arith.constant 0 : index
    %26 = vector.load %arg4[%c0_9, %c0_10] : memref<16x32xbf16, #tpu.memory_space<vmem>>, vector<16x32xbf16>
    tpu.vector_store %arg4[%c0_9, %c0_10], %25 {strides = array<i32>} : memref<16x32xbf16, #tpu.memory_space<vmem>>, vector<16x32xbf16>,
    return
  }
  func.func @transform_0(%arg0: i32) -> (i32, i32) {
    %c0_i32 = arith.constant 0 : i32
    %c0_i32_0 = arith.constant 0 : i32
    return %arg0, %c0_i32 : i32, i32
  }
  func.func @transform_1(%arg0: i32) -> (i32, i32) {
    %c0_i32 = arith.constant 0 : i32
    %c0_i32_0 = arith.constant 0 : i32
    %c0_i32_1 = arith.constant 0 : i32
    return %c0_i32, %c0_i32_0 : i32, i32
  }
  func.func @transform_2(%arg0: i32) -> (i32, i32) {
    %c0_i32 = arith.constant 0 : i32
    %c0_i32_0 = arith.constant 0 : i32
    %c0_i32_1 = arith.constant 0 : i32
    return %c0_i32, %c0_i32_0 : i32, i32
  }
  func.func @transform_3(%arg0: i32) -> (i32, i32) {
    %c0_i32 = arith.constant 0 : i32
    %c0_i32_0 = arith.constant 0 : i32
    return %arg0, %c0_i32 : i32, i32
  }
}

</mosaic_0001>

<llo_original>
// kernel: tpu_custom_call.1
$region0: #{tpu_custom_call.1}
  #allocation0 [shape = 'u32[]', space=smem, size = 0x4, offset = 0x4, fixed_abs, tag = 'smem constant byte address 0x4 - core index']
  #allocation1 [shape = 'u32[72,128]{1,0:T(1,128)}', space=vmem, size = 0x9000, scoped, tag = 'internal scratch']
  %s0 = inlined_call_operand.hbm [shape: f32[16,32], index: 0, kind: input, shape index: {}]
  %s1 = inlined_call_operand.hbm [shape: f32[1,32], index: 1, kind: input, shape index: {}]
  %s2 = inlined_call_operand.vmem [shape: f32[1,32], index: 2, kind: input, shape index: {}]
  %s3 = inlined_call_operand.hbm [shape: bf16[16,32], index: 3, kind: output, shape index: {}]
  %s4 = sld [smem:[#allocation0]]
  $region30: #{tpu_custom_call.1} parent=0
    _
  %s6 = ssub.s32 1, %s4
  %s7 = scalar_select 0, %s6, %s4
  $region1: #{tpu_custom_call.1} parent=0
    #allocation2 [shape = 'u8[8192]{0}', space=vmem, size = 0x2000, scoped, tag = 'input window, operand 0, single buffered']
    #allocation3 [shape = 's32[1]{0}', space=sflag, size = 0x4, scoped, tag = 'scoped memory for tpu_custom_call.1']
    #allocation4 [shape = 's32[1]{0}', space=sflag, size = 0x4, scoped, tag = 'scoped memory for tpu_custom_call.1']
    #allocation5 [shape = 'u8[512]{0}', space=vmem, size = 0x400, scoped, tag = 'input window, operand 1, single buffered']
    #allocation6 [shape = 's32[1]{0}', space=sflag, size = 0x4, scoped, tag = 'scoped memory for tpu_custom_call.1']
    #allocation7 [shape = 'u8[4096]{0}', space=vmem, size = 0x1000, scoped, tag = 'output window, operand 0, single buffered']
    %8 = vsyncpa [#allocation3], 0
    %9 = vsyncpa [#allocation6], 0
    %10 = vsyncpa [#allocation4], 0
    // Predicated region
    $region2: #{tpu_custom_call.1} parent=1 // pred_check
      _
    $region3: #{tpu_custom_call.1} parent=1 // pred_check_branch
      %12 = sbr.rel (0) target = $region5
    $region4: #{tpu_custom_call.1} parent=1 // pred_region
      %14 = vsyncadd [#allocation3], 0
      %s15 = sshll.u32 %s0, 4
      %s16 = int_to_ptr.hbm [resolvable:$true] %s15
      %s17 = sshll.u32 [#allocation2], 4
      %s18 = int_to_ptr.vmem [resolvable:$true] %s17
      %23 = dma.hbm_to_vmem [thread:$0]  %s16, 256, %s18, [#allocation3], 128, 128, 8
    $region5: #{tpu_custom_call.1} parent=1 // pred_fallthru
      _
    // Predicated region
    $region6: #{tpu_custom_call.1} parent=1 // pred_check
      _
    $region7: #{tpu_custom_call.1} parent=1 // pred_check_branch
      %25 = sbr.rel (0) target = $region9
    $region8: #{tpu_custom_call.1} parent=1 // pred_region
      %27 = vsyncadd [#allocation6], 0
      %s29 = sshll.u32 %s1, 4
      %s30 = int_to_ptr.hbm [resolvable:$true] %s29
      %s31 = sshll.u32 [#allocation5], 4
      %s32 = int_to_ptr.vmem [resolvable:$true] %s31
      %34 = dma.hbm_to_vmem [thread:$0]  %s30, 16, %s32, [#allocation6]
    $region9: #{tpu_custom_call.1} parent=1 // pred_fallthru
      _
    // Predicated region
    $region10: #{tpu_custom_call.1} parent=1 // pred_check
      _
    $region11: #{tpu_custom_call.1} parent=1 // pred_check_branch
      %36 = sbr.rel (0) target = $region13
    $region12: #{tpu_custom_call.1} parent=1 // pred_region
      _
    $region13: #{tpu_custom_call.1} parent=1 // pred_fallthru
      _
    // Predicated region
    $region14: #{tpu_custom_call.1} parent=1 // pred_check
      _
    $region15: #{tpu_custom_call.1} parent=1 // pred_check_branch
      %38 = sbr.rel (0) target = $region17
    $region16: #{tpu_custom_call.1} parent=1 // pred_region
      %40 = dma.done [#allocation3], 256
    $region17: #{tpu_custom_call.1} parent=1 // pred_fallthru
      _
    // Predicated region
    $region18: #{tpu_custom_call.1} parent=1 // pred_check
      _
    $region19: #{tpu_custom_call.1} parent=1 // pred_check_branch
      %42 = sbr.rel (0) target = $region21
    $region20: #{tpu_custom_call.1} parent=1 // pred_region
      %44 = dma.done [#allocation6], 16
    $region21: #{tpu_custom_call.1} parent=1 // pred_fallthru
      _
    %v45 = vld [vmem:[#allocation2] sm:$0xff]
    %v46 = vld [vmem:[#allocation2 + $0x8] sm:$0xff]
    %vm47 = vcmask 261120
    %v48 = vsel %vm47, %v45, 0.0
    %49 = vadd.xlane.f32.xlu0 %v48
    %v50 = vpop.xlane.xlu0 %49
    %v51 = vsel %vm47, %v46, 0.0
    %52 = vadd.xlane.f32.xlu0 %v51
    %v53 = vpop.xlane.xlu0 %52
    %v54 = vrcp.pop 32.0
    %v55 = vmul.f32 32.0, %v54
    %v56 = vsub.f32 1.0, %v55
    %v57 = vmul.f32 %v54, %v56
    %v58 = vadd.f32 %v54, %v57
    %vm59 = vweird.f32 %v54
    %v60 = vsel %vm59, %v54, %v58
    %v61 = vmul.f32 %v50, %v60
    %v62 = vmul.f32 %v53, %v60
    %v63 = vsub.f32 %v45, %v61
    %v64 = vsub.f32 %v46, %v62
    %v65 = vmul.f32 %v63, %v63
    %v66 = vmul.f32 %v64, %v64
    %v67 = vsel %vm47, %v65, 0.0
    %68 = vadd.xlane.f32.xlu0 %v67
    %v69 = vpop.xlane.xlu0 %68
    %v70 = vsel %vm47, %v66, 0.0
    %71 = vadd.xlane.f32.xlu0 %v70
    %v72 = vpop.xlane.xlu0 %71
    %v73 = vmul.f32 %v69, %v60
    %v74 = vmul.f32 %v72, %v60
    %v75 = vadd.f32 %v73, 1e-12
    %v76 = vadd.f32 %v74, 1e-12
    %v77 = vrsqrt.pop %v75
    %v78 = vmul.f32 %v77, %v75
    %v79 = vmul.f32 %v78, %v77
    %v80 = vmul.f32 0.5, %v79
    %v81 = vsub.f32 1.5, %v80
    %v82 = vmul.f32 %v77, %v81
    %vm83 = vweird.f32 %v75
    %vm84 = vweird.f32 %v77
    %vm85 = vmor %vm83, %vm84
    %v86 = vsel %vm85, %v77, %v82
    %v87 = vrsqrt.pop %v76
    %v88 = vmul.f32 %v87, %v76
    %v89 = vmul.f32 %v88, %v87
    %v90 = vmul.f32 0.5, %v89
    %v91 = vsub.f32 1.5, %v90
    %v92 = vmul.f32 %v87, %v91
    %vm93 = vweird.f32 %v76
    %vm94 = vweird.f32 %v87
    %vm95 = vmor %vm93, %vm94
    %v96 = vsel %vm95, %v87, %v92
    %v97 = vmul.f32 %v63, %v86
    %v98 = vmul.f32 %v64, %v96
    %v99 = vld [vmem:[#allocation5] sm:$0x1]
    %v101 = vperm.slane %v99, 0
    %v103 = vmul.f32 %v97, %v101
    %v104 = vmul.f32 %v98, %v101
    %v105 = vld [vmem:[%s2] sm:$0x1]
    %v107 = vperm.slane %v105, 0
    %v109 = vadd.f32 %v103, %v107
    %v110 = vadd.f32 %v104, %v107
    %v111 = vpack.c.bf16 %v109, %v109
    %v112 = vpack.c.bf16 %v110, %v110
    %vm113 = vcmask 257024
    %114 = vst.msk [vmem:[#allocation7] sm:$0xf] %vm113, %v111
    %115 = vst.msk [vmem:[#allocation7 + $0x4] sm:$0xf] %vm113, %v112
    // Predicated region
    $region22: #{tpu_custom_call.1} parent=1 // pred_check
      _
    $region23: #{tpu_custom_call.1} parent=1 // pred_check_branch
      %117 = sbr.rel (0) target = $region25
    $region24: #{tpu_custom_call.1} parent=1 // pred_region
      %119 = vsyncadd [#allocation4], 0
      %s120 = sshll.u32 [#allocation7], 4
      %s121 = int_to_ptr.vmem [resolvable:$true] %s120
      %s122 = sshll.u32 %s3, 4
      %s123 = int_to_ptr.hbm [resolvable:$true] %s122
      %128 = dma.vmem_to_hbm [thread:$0]  %s121, 128, %s123, [#allocation4], 64, 64, 4
    $region25: #{tpu_custom_call.1} parent=1 // pred_fallthru
      _
    // Predicated region
    $region26: #{tpu_custom_call.1} parent=1 // pred_check
      _
    $region27: #{tpu_custom_call.1} parent=1 // pred_check_branch
      %130 = sbr.rel (0) target = $region29
    $region28: #{tpu_custom_call.1} parent=1 // pred_region
      %132 = dma.done [#allocation4], 128
    $region29: #{tpu_custom_call.1} parent=1 // pred_fallthru
      _
    %133 = vsyncpa [#allocation3], 1
    %134 = vsyncpa [#allocation6], 1
    %135 = vsyncpa [#allocation4], 1

</llo_original>
